<compile_context>
chip_gen: v5e
topology: v5e:2x2
jax: 0.10.0
libtpu: 0.0.40
codegen_flags: <defaults>
</compile_context>

<pallas_src>
import jax
import jax.numpy as jnp
from jax.experimental import pallas as pl
from jax.experimental.pallas import tpu as pltpu


# ----------------------------------------------------------------------------
# Pallas kernel: elementwise fusion of the two modalities (v ⊙ q).
# ----------------------------------------------------------------------------
def _fusion_kernel(v_ref, q_ref, o_ref):
    # Whole-tile elementwise product on the VPU.
    o_ref[...] = v_ref[...] * q_ref[...]


def pallas_elementwise_fusion(
    input_v,
    input_q,
    *,
    block_bytes=2 * 1024 * 1024,        # per-operand block (~2 MiB default)
    vmem_limit_bytes=32 * 1024 * 1024,  # explicit scoped-VMEM request
):
    """Elementwise fusion kernel for arbitrary (matching) shapes/dtypes.

    The wrapper flattens both inputs, pads to a lane-dense 2-D slab
    (rows, lane) with lane a multiple of 128, tiles rows into VMEM-budget
    sized blocks, runs the Pallas kernel over a 1-D "parallel" grid, and
    reshapes the result back. Elementwise math is layout-agnostic, so all of
    this is free plumbing.
    """
    assert input_v.shape == input_q.shape, "fusion inputs must match in shape"
    assert input_v.dtype == input_q.dtype, "fusion inputs must match in dtype"

    orig_shape = input_v.shape
    dtype = input_v.dtype
    itemsize = jnp.dtype(dtype).itemsize
    n = 1
    for d in orig_shape:
        n *= d
    assert n > 0, "empty input"

    # Sublane packing: 8 rows per vreg for 32-bit, 16 for 16-bit, 32 for 8-bit.
    pack = 8 * max(1, 4 // itemsize)

    # Lane width: large multiple of 128 (wide unmasked stores, big DMAs),
    # capped by the problem size.
    lane = min(4096, pl.cdiv(n, 128) * 128)
    rows = pl.cdiv(n, lane)

    # Row-block size from the VMEM budget (2 inputs + 1 output, x2 buffers).
    tile_r = max(1, block_bytes // (lane * itemsize))
    if tile_r >= rows:
        # Single row-block spanning the full dim: any size is legal.
        tile_r = rows
    else:
        # Partial block: must be a multiple of the sublane packing (>= 8).
        tile_r = max(pack, (tile_r // pack) * pack)

    # Keep a few grid steps alive for v7x's two TensorCores — but only when
    # the array is large enough that each step still moves a sizeable block.
    min_steps = 4
    if (pl.cdiv(rows, tile_r) < min_steps
            and rows * lane * itemsize >= min_steps * 512 * 1024):
        tile_r = max(pack, (pl.cdiv(rows, min_steps) // pack) * pack)

    rows_padded = pl.cdiv(rows, tile_r) * tile_r
    n_padded = rows_padded * lane

    # Flatten + zero-pad in the wrapper (removes divisibility constraints).
    v_flat = input_v.reshape(-1)
    q_flat = input_q.reshape(-1)
    if n_padded != n:
        pad = n_padded - n
        v_flat = jnp.pad(v_flat, (0, pad))
        q_flat = jnp.pad(q_flat, (0, pad))
    v2d = v_flat.reshape(rows_padded, lane)
    q2d = q_flat.reshape(rows_padded, lane)

    spec = pl.BlockSpec((tile_r, lane), lambda i: (i, 0))

    out2d = pl.pallas_call(
        _fusion_kernel,
        out_shape=jax.ShapeDtypeStruct((rows_padded, lane), dtype),
        grid=(rows_padded // tile_r,),
        in_specs=[spec, spec],
        out_specs=spec,
        compiler_params=pltpu.CompilerParams(
            dimension_semantics=("parallel",),
            vmem_limit_bytes=vmem_limit_bytes,
        ),
    )(v2d, q2d)

    out_flat = out2d.reshape(-1)
    if n_padded != n:
        out_flat = out_flat[:n]
    return out_flat.reshape(orig_shape)


# ----------------------------------------------------------------------------
# Faithful mirror of the abstract PyTorch module.
# ----------------------------------------------------------------------------
class AbstractFusion:
    """JAX mirror of fusion.AbstractFusion — an abstract base class."""

    def __init__(self, opt=None):
        self.opt = opt if opt is not None else {}

    def forward(self, input_v, input_q):
        # Exact semantics of the reference module.
        raise NotImplementedError

    def __call__(self, *args, **kwargs):
        return self.forward(*args, **kwargs)


class _DemoElementwiseFusion(AbstractFusion):
    """Minimal concrete subclass used only to exercise the Pallas kernel."""
    # TODO(synk): concrete fusion math (MUTAN/MLB/etc.) is defined by real
    # subclasses of AbstractFusion, not by the abstract reference module.

    def forward(self, input_v, input_q):
        return pallas_elementwise_fusion(input_v, input_q)


if __name__ == "__main__":
    key = jax.random.PRNGKey(0)
    kv, kq, kv2, kq2, kv3, kq3, kv4, kq4 = jax.random.split(key, 8)

    # Verify the abstract forward truly raises (exact reference semantics).
    abstract = AbstractFusion(opt={})
    try:
        abstract(jnp.zeros((2, 4)), jnp.zeros((2, 4)))
        raise AssertionError("AbstractFusion.forward should raise")
    except NotImplementedError:
        pass

    fusion = _DemoElementwiseFusion(opt={})

    # 1) Small canonical fusion shapes [batch, hidden].
    B, H = 8, 256
    v1 = jax.random.normal(kv, (B, H), dtype=jnp.float32)
    q1 = jax.random.normal(kq, (B, H), dtype=jnp.float32)
    o1 = jax.block_until_ready(fusion(v1, q1))
    assert o1.shape == (B, H)
    assert jnp.allclose(o1, v1 * q1, atol=1e-6, rtol=1e-6)

    # 2) Multi-step pipelined grid (small block_bytes forces several steps).
    v2 = jax.random.normal(kv2, (128, 1024), dtype=jnp.float32)
    q2 = jax.random.normal(kq2, (128, 1024), dtype=jnp.float32)
    o2 = jax.block_until_ready(
        pallas_elementwise_fusion(v2, q2, block_bytes=64 * 1024))
    assert jnp.allclose(o2, v2 * q2, atol=1e-6, rtol=1e-6)

    # 3) Ragged shape (not a multiple of 128) — padded/unpadded in wrapper.
    v3 = jax.random.normal(kv3, (3, 5, 7), dtype=jnp.float32)
    q3 = jax.random.normal(kq3, (3, 5, 7), dtype=jnp.float32)
    o3 = jax.block_until_ready(fusion(v3, q3))
    assert jnp.allclose(o3, v3 * q3, atol=1e-6, rtol=1e-6)

    # 4) bf16 inputs exercise the 16-row sublane packing path.
    v4 = jax.random.normal(kv4, (16, 384), dtype=jnp.bfloat16)
    q4 = jax.random.normal(kq4, (16, 384), dtype=jnp.bfloat16)
    o4 = jax.block_until_ready(fusion(v4, q4))
    assert jnp.allclose(o4.astype(jnp.float32),
                        (v4 * q4).astype(jnp.float32),
                        atol=1e-2, rtol=1e-2)

    print("KERNEL_OK")
</pallas_src>

<mosaic_0001>
module attributes {stable_mosaic.version = 11 : i64} {
  func.func @_fusion_kernel(%arg0: i32, %arg1: memref<1x2048xf32, #tpu.memory_space<vmem>>, %arg2: memref<1x2048xf32, #tpu.memory_space<vmem>>, %arg3: memref<1x2048xf32, #tpu.memory_space<vmem>>) attributes {dimension_semantics = [#tpu.dimension_semantics<parallel>], iteration_bounds = array<i64: 1>, scalar_prefetch = 0 : i64, scratch_operands = 0 : i64, tpu.core_type = #tpu.core_type<tc>, window_params = [{transform_indices = @transform_0, window_bounds = array<i64: 1, 2048>}, {transform_indices = @transform_1, window_bounds = array<i64: 1, 2048>}, {transform_indices = @transform_2, window_bounds = array<i64: 1, 2048>}]} {
    %c0 = arith.constant 0 : index
    %c0_0 = arith.constant 0 : index
    %0 = vector.load %arg1[%c0, %c0_0] : memref<1x2048xf32, #tpu.memory_space<vmem>>, vector<1x2048xf32>
    %c0_1 = arith.constant 0 : index
    %c0_2 = arith.constant 0 : index
    %1 = vector.load %arg2[%c0_1, %c0_2] : memref<1x2048xf32, #tpu.memory_space<vmem>>, vector<1x2048xf32>
    %2 = arith.mulf %0, %1 : vector<1x2048xf32>
    %c0_3 = arith.constant 0 : index
    %c0_4 = arith.constant 0 : index
    %3 = vector.load %arg3[%c0_3, %c0_4] : memref<1x2048xf32, #tpu.memory_space<vmem>>, vector<1x2048xf32>
    tpu.vector_store %arg3[%c0_3, %c0_4], %2 {strides = array<i32>} : memref<1x2048xf32, #tpu.memory_space<vmem>>, vector<1x2048xf32>,
    return
  }
  func.func @transform_0(%arg0: i32) -> (i32, i32) {
    %c0_i32 = arith.constant 0 : i32
    %c0_i32_0 = arith.constant 0 : i32
    return %arg0, %c0_i32 : i32, i32
  }
  func.func @transform_1(%arg0: i32) -> (i32, i32) {
    %c0_i32 = arith.constant 0 : i32
    %c0_i32_0 = arith.constant 0 : i32
    return %arg0, %c0_i32 : i32, i32
  }
  func.func @transform_2(%arg0: i32) -> (i32, i32) {
    %c0_i32 = arith.constant 0 : i32
    %c0_i32_0 = arith.constant 0 : i32
    return %arg0, %c0_i32 : i32, i32
  }
}

</mosaic_0001>

<llo_original>
// kernel: tpu_custom_call.1
$region0: #{tpu_custom_call.1}
  #allocation0 [shape = 'u32[]', space=smem, size = 0x4, offset = 0x4, fixed_abs, tag = 'smem constant byte address 0x4 - core index']
  #allocation1 [shape = 'u32[72,128]{1,0:T(1,128)}', space=vmem, size = 0x9000, scoped, tag = 'internal scratch']
  %s0 = inlined_call_operand.hbm [shape: f32[1,2048], index: 0, kind: input, shape index: {}]
  %s1 = inlined_call_operand.hbm [shape: f32[1,2048], index: 1, kind: input, shape index: {}]
  %s2 = inlined_call_operand.hbm [shape: f32[1,2048], index: 2, kind: output, shape index: {}]
  %s3 = sld [smem:[#allocation0]]
  $region26: #{tpu_custom_call.1} parent=0
    _
  %s5 = ssub.s32 1, %s3
  %s6 = scalar_select 0, %s5, %s3
  $region1: #{tpu_custom_call.1} parent=0
    #allocation2 [shape = 'u8[8192]{0}', space=vmem, size = 0x2000, scoped, tag = 'input window, operand 0, single buffered']
    #allocation3 [shape = 's32[1]{0}', space=sflag, size = 0x4, scoped, tag = 'scoped memory for tpu_custom_call.1']
    #allocation4 [shape = 's32[1]{0}', space=sflag, size = 0x4, scoped, tag = 'scoped memory for tpu_custom_call.1']
    #allocation5 [shape = 'u8[8192]{0}', space=vmem, size = 0x2000, scoped, tag = 'input window, operand 1, single buffered']
    #allocation6 [shape = 's32[1]{0}', space=sflag, size = 0x4, scoped, tag = 'scoped memory for tpu_custom_call.1']
    #allocation7 [shape = 'u8[8192]{0}', space=vmem, size = 0x2000, scoped, tag = 'output window, operand 0, single buffered']
    %7 = vsyncpa [#allocation3], 0
    %8 = vsyncpa [#allocation6], 0
    %9 = vsyncpa [#allocation4], 0
    // Predicated region
    $region2: #{tpu_custom_call.1} parent=1 // pred_check
      _
    $region3: #{tpu_custom_call.1} parent=1 // pred_check_branch
      %11 = sbr.rel (0) target = $region5
    $region4: #{tpu_custom_call.1} parent=1 // pred_region
      %13 = vsyncadd [#allocation3], 0
      %s15 = sshll.u32 %s0, 4
      %s16 = int_to_ptr.hbm [resolvable:$true] %s15
      %s17 = sshll.u32 [#allocation2], 4
      %s18 = int_to_ptr.vmem [resolvable:$true] %s17
      %20 = dma.hbm_to_vmem [thread:$0]  %s16, 256, %s18, [#allocation3]
    $region5: #{tpu_custom_call.1} parent=1 // pred_fallthru
      _
    // Predicated region
    $region6: #{tpu_custom_call.1} parent=1 // pred_check
      _
    $region7: #{tpu_custom_call.1} parent=1 // pred_check_branch
      %22 = sbr.rel (0) target = $region9
    $region8: #{tpu_custom_call.1} parent=1 // pred_region
      %24 = vsyncadd [#allocation6], 0
      %s26 = sshll.u32 %s1, 4
      %s27 = int_to_ptr.hbm [resolvable:$true] %s26
      %s28 = sshll.u32 [#allocation5], 4
      %s29 = int_to_ptr.vmem [resolvable:$true] %s28
      %31 = dma.hbm_to_vmem [thread:$0]  %s27, 256, %s29, [#allocation6]
    $region9: #{tpu_custom_call.1} parent=1 // pred_fallthru
      _
    // Predicated region
    $region10: #{tpu_custom_call.1} parent=1 // pred_check
      _
    $region11: #{tpu_custom_call.1} parent=1 // pred_check_branch
      %33 = sbr.rel (0) target = $region13
    $region12: #{tpu_custom_call.1} parent=1 // pred_region
      %35 = dma.done [#allocation3], 256
    $region13: #{tpu_custom_call.1} parent=1 // pred_fallthru
      _
    // Predicated region
    $region14: #{tpu_custom_call.1} parent=1 // pred_check
      _
    $region15: #{tpu_custom_call.1} parent=1 // pred_check_branch
      %37 = sbr.rel (0) target = $region17
    $region16: #{tpu_custom_call.1} parent=1 // pred_region
      %39 = dma.done [#allocation6], 256
    $region17: #{tpu_custom_call.1} parent=1 // pred_fallthru
      _
    %v40 = vld [vmem:[#allocation2] sm:$0xff]
    %v41 = vld [vmem:[#allocation2 + $0x8] sm:$0xff]
    %v42 = vld [vmem:[#allocation5] sm:$0xff]
    %v43 = vld [vmem:[#allocation5 + $0x8] sm:$0xff]
    %v44 = vmul.f32 %v40, %v42
    %v45 = vmul.f32 %v41, %v43
    %46 = vst [vmem:[#allocation7] sm:$0xff] %v44
    %47 = vst [vmem:[#allocation7 + $0x8] sm:$0xff] %v45
    // Predicated region
    $region18: #{tpu_custom_call.1} parent=1 // pred_check
      _
    $region19: #{tpu_custom_call.1} parent=1 // pred_check_branch
      %49 = sbr.rel (0) target = $region21
    $region20: #{tpu_custom_call.1} parent=1 // pred_region
      %51 = vsyncadd [#allocation4], 0
      %s53 = sshll.u32 [#allocation7], 4
      %s54 = int_to_ptr.vmem [resolvable:$true] %s53
      %s55 = sshll.u32 %s2, 4
      %s56 = int_to_ptr.hbm [resolvable:$true] %s55
      %58 = dma.vmem_to_hbm [thread:$0]  %s54, 256, %s56, [#allocation4]
    $region21: #{tpu_custom_call.1} parent=1 // pred_fallthru
      _
    // Predicated region
    $region22: #{tpu_custom_call.1} parent=1 // pred_check
      _
    $region23: #{tpu_custom_call.1} parent=1 // pred_check_branch
      %60 = sbr.rel (0) target = $region25
    $region24: #{tpu_custom_call.1} parent=1 // pred_region
      %62 = dma.done [#allocation4], 256
    $region25: #{tpu_custom_call.1} parent=1 // pred_fallthru
      _
    %63 = vsyncpa [#allocation3], 1
    %64 = vsyncpa [#allocation6], 1
    %65 = vsyncpa [#allocation4], 1

</llo_original>
